<compile_context>
chip_gen: v6e
topology: v6e:2x2x1
jax: 0.10.0
libtpu: 0.0.40
codegen_flags: <defaults>
</compile_context>

<pallas_src>
import jax
import jax.numpy as jnp
from jax.experimental import pallas as pl
from jax.experimental.pallas import tpu as pltpu


def cls_head_kernel(x_ref, w1_ref, b1_ref, w2_ref, b2_ref, o_ref):
    # x_ref: (tb, 768) bf16 tile of pooled features
    x = x_ref[...]
    # Linear(768 -> 64): bf16 x bf16 -> f32 accumulation on the MXU
    h = jnp.dot(x, w1_ref[...], preferred_element_type=jnp.float32) + b1_ref[...]
    # LeakyReLU (negative_slope = 0.01, the nn.LeakyReLU default), f32 on the VPU
    h = jnp.where(h > 0, h, 0.01 * h)
    # Linear(64 -> 128-padded-2): tiny f32 matmul, lane-dense output slab
    o = jnp.dot(h, w2_ref[...], preferred_element_type=jnp.float32) + b2_ref[...]
    o_ref[...] = o.astype(o_ref.dtype)


def _pick_tile(B):
    """Large tiles, but keep >= 2 grid steps when B allows (v7x has 2 TCs)."""
    if B <= 8:
        return 8
    tb = min(512, B // 2)        # >= 2 steps for the megacore batch split
    tb = max(8, (tb // 8) * 8)   # sublane-aligned (multiple of 8)
    return tb


def vtu_cls_head(pooler_output, w1, b1, w2, b2, *, tb=None):
    """pooler_output: [B, 768] float -> logits [B, 2] float32."""
    B, D = pooler_output.shape
    H = w1.shape[1]     # 64
    C = w2.shape[1]     # 2
    C_PAD = 128         # lane-dense output width

    if tb is None:
        tb = _pick_tile(B)
    n_tiles = pl.cdiv(B, tb)
    Bp = n_tiles * tb

    # bf16 features / first-layer weights; pad batch to a tile multiple.
    x = pooler_output.astype(jnp.bfloat16)
    if Bp != B:
        x = jnp.pad(x, ((0, Bp - B), (0, 0)))
    w1b = w1.astype(jnp.bfloat16)
    b1f = jnp.asarray(b1, jnp.float32).reshape(1, H)
    # Zero-pad the 2-wide head output to 128 lanes (unmasked stores).
    w2p = jnp.pad(jnp.asarray(w2, jnp.float32), ((0, 0), (0, C_PAD - C)))
    b2p = jnp.pad(jnp.asarray(b2, jnp.float32).reshape(1, C), ((0, 0), (0, C_PAD - C)))

    flops = 2 * Bp * D * H + 2 * Bp * H * C_PAD
    bytes_accessed = (Bp * D * 2          # x (bf16)
                      + D * H * 2         # W1 (bf16)
                      + H * C_PAD * 4 + H * 4 + C_PAD * 4
                      + Bp * C_PAD * 4)   # output slab

    out = pl.pallas_call(
        cls_head_kernel,
        out_shape=jax.ShapeDtypeStruct((Bp, C_PAD), jnp.float32),
        grid_spec=pltpu.PrefetchScalarGridSpec(
            num_scalar_prefetch=0,
            grid=(n_tiles,),
            in_specs=[
                pl.BlockSpec((tb, D), lambda i: (i, 0)),       # x tile over batch
                pl.BlockSpec((D, H), lambda i: (0, 0)),        # W1 (resident)
                pl.BlockSpec((1, H), lambda i: (0, 0)),        # b1 (resident)
                pl.BlockSpec((H, C_PAD), lambda i: (0, 0)),    # W2 padded (resident)
                pl.BlockSpec((1, C_PAD), lambda i: (0, 0)),    # b2 padded (resident)
            ],
            out_specs=pl.BlockSpec((tb, C_PAD), lambda i: (i, 0)),
        ),
        compiler_params=pltpu.CompilerParams(
            dimension_semantics=("parallel",),
            vmem_limit_bytes=48 * 1024 * 1024,   # big tiles on v5e; < v7x 64 MiB cap
        ),
        cost_estimate=pl.CostEstimate(
            flops=flops, transcendentals=0, bytes_accessed=bytes_accessed),
    )(x, w1b, b1f, w2p, b2p)

    return out[:B, :C]


def _reference(x, w1, b1, w2, b2, *, bf16_inputs=True):
    """Pure-JAX reference of the fused head (optionally matching bf16 input cast)."""
    if bf16_inputs:
        xr = x.astype(jnp.bfloat16).astype(jnp.float32)
        w1r = w1.astype(jnp.bfloat16).astype(jnp.float32)
    else:
        xr, w1r = x, w1
    h = xr @ w1r + b1
    h = jnp.where(h > 0, h, 0.01 * h)
    return h @ w2 + b2


if __name__ == "__main__":
    key = jax.random.PRNGKey(0)
    k_x, k_w1, k_b1, k_w2, k_b2, k_x2 = jax.random.split(key, 6)

    B, D, H, C = 8, 768, 64, 2

    # Synthetic stand-in for frozen backbone pooler_output.
    x = jax.random.normal(k_x, (B, D), dtype=jnp.float32)

    # Deterministic parameter init (shapes from nn.Linear(768,64) / nn.Linear(64,2)).
    w1 = jax.random.normal(k_w1, (D, H), dtype=jnp.float32) * (1.0 / jnp.sqrt(D))
    b1 = jax.random.normal(k_b1, (1, H), dtype=jnp.float32) * 0.01
    w2 = jax.random.normal(k_w2, (H, C), dtype=jnp.float32) * (1.0 / jnp.sqrt(H))
    b2 = jax.random.normal(k_b2, (1, C), dtype=jnp.float32) * 0.01

    out = jax.block_until_ready(vtu_cls_head(x, w1, b1, w2, b2))
    assert out.shape == (B, C)
    # Tight check vs. the same bf16-cast inputs (MXU accumulates in f32).
    ref_bf = _reference(x, w1, b1, w2, b2, bf16_inputs=True)
    assert jnp.allclose(out, ref_bf, atol=1e-3, rtol=1e-3)
    # Loose check vs. full-f32 semantics of the PyTorch head.
    ref_f32 = _reference(x, w1, b1, w2, b2, bf16_inputs=False)
    assert jnp.allclose(out, ref_f32, atol=5e-2, rtol=5e-2)

    # Exercise ragged batch (padding path) and a multi-step "parallel" grid.
    B2 = 36
    x2 = jax.random.normal(k_x2, (B2, D), dtype=jnp.float32)
    out2 = jax.block_until_ready(vtu_cls_head(x2, w1, b1, w2, b2))
    ref2 = _reference(x2, w1, b1, w2, b2, bf16_inputs=True)
    assert out2.shape == (B2, C)
    assert jnp.allclose(out2, ref2, atol=1e-3, rtol=1e-3)

    print("KERNEL_OK")
</pallas_src>

<mosaic_0001>
module attributes {stable_mosaic.version = 11 : i64} {
  func.func @cls_head_kernel(%arg0: i32, %arg1: memref<8x768xbf16, #tpu.memory_space<vmem>>, %arg2: memref<768x64xbf16, #tpu.memory_space<vmem>>, %arg3: memref<1x64xf32, #tpu.memory_space<vmem>>, %arg4: memref<64x128xf32, #tpu.memory_space<vmem>>, %arg5: memref<1x128xf32, #tpu.memory_space<vmem>>, %arg6: memref<8x128xf32, #tpu.memory_space<vmem>>) attributes {dimension_semantics = [#tpu.dimension_semantics<parallel>], iteration_bounds = array<i64: 1>, scalar_prefetch = 0 : i64, scratch_operands = 0 : i64, tpu.core_type = #tpu.core_type<tc>, window_params = [{transform_indices = @transform_0, window_bounds = array<i64: 8, 768>}, {pipeline_mode = #tpu.pipeline_mode<synchronous>, transform_indices = @transform_1, window_bounds = array<i64: 768, 64>}, {pipeline_mode = #tpu.pipeline_mode<synchronous>, transform_indices = @transform_2, window_bounds = array<i64: 1, 64>}, {pipeline_mode = #tpu.pipeline_mode<synchronous>, transform_indices = @transform_3, window_bounds = array<i64: 64, 128>}, {pipeline_mode = #tpu.pipeline_mode<synchronous>, transform_indices = @transform_4, window_bounds = array<i64: 1, 128>}, {transform_indices = @transform_5, window_bounds = array<i64: 8, 128>}]} {
    %c0 = arith.constant 0 : index
    %c0_0 = arith.constant 0 : index
    %0 = vector.load %arg1[%c0, %c0_0] : memref<8x768xbf16, #tpu.memory_space<vmem>>, vector<8x768xbf16>
    %c0_1 = arith.constant 0 : index
    %c0_2 = arith.constant 0 : index
    %1 = vector.load %arg2[%c0_1, %c0_2] : memref<768x64xbf16, #tpu.memory_space<vmem>>, vector<768x64xbf16>
    %cst = arith.constant dense<0.000000e+00> : vector<8x64xf32>
    %2 = tpu.matmul %0, %1, %cst {dimension_numbers = #tpu.dot_dimension_numbers<[1], [0], [0], [1], [0, 0, 1, 1], [], []>} : vector<8x768xbf16>, vector<768x64xbf16>, vector<8x64xf32> -> vector<8x64xf32>
    %c0_3 = arith.constant 0 : index
    %c0_4 = arith.constant 0 : index
    %3 = vector.load %arg3[%c0_3, %c0_4] : memref<1x64xf32, #tpu.memory_space<vmem>>, vector<1x64xf32>
    %4 = vector.broadcast %3 : vector<1x64xf32> to vector<8x64xf32>
    %5 = arith.addf %2, %4 : vector<8x64xf32>
    %cst_5 = arith.constant 0.000000e+00 : f32
    %6 = vector.broadcast %cst_5 : f32 to vector<8x64xf32>
    %7 = arith.cmpf ogt, %5, %6 : vector<8x64xf32>
    %cst_6 = arith.constant 0.00999999977 : f32
    %8 = vector.broadcast %cst_6 : f32 to vector<8x64xf32>
    %9 = arith.mulf %8, %5 : vector<8x64xf32>
    %10 = arith.select %7, %5, %9 : vector<8x64xi1>, vector<8x64xf32>
    %c0_7 = arith.constant 0 : index
    %c0_8 = arith.constant 0 : index
    %11 = vector.load %arg4[%c0_7, %c0_8] : memref<64x128xf32, #tpu.memory_space<vmem>>, vector<64x128xf32>
    %cst_9 = arith.constant dense<0.000000e+00> : vector<8x128xf32>
    %12 = tpu.matmul %10, %11, %cst_9 {dimension_numbers = #tpu.dot_dimension_numbers<[1], [0], [0], [1], [0, 0, 1, 1], [], []>} : vector<8x64xf32>, vector<64x128xf32>, vector<8x128xf32> -> vector<8x128xf32>
    %c0_10 = arith.constant 0 : index
    %c0_11 = arith.constant 0 : index
    %13 = vector.load %arg5[%c0_10, %c0_11] : memref<1x128xf32, #tpu.memory_space<vmem>>, vector<1x128xf32>
    %14 = vector.broadcast %13 : vector<1x128xf32> to vector<8x128xf32>
    %15 = arith.addf %12, %14 : vector<8x128xf32>
    %c0_12 = arith.constant 0 : index
    %c0_13 = arith.constant 0 : index
    %16 = vector.load %arg6[%c0_12, %c0_13] : memref<8x128xf32, #tpu.memory_space<vmem>>, vector<8x128xf32>
    tpu.vector_store %arg6[%c0_12, %c0_13], %15 {strides = array<i32>} : memref<8x128xf32, #tpu.memory_space<vmem>>, vector<8x128xf32>,
    return
  }
  func.func @transform_0(%arg0: i32) -> (i32, i32) {
    %c0_i32 = arith.constant 0 : i32
    %c0_i32_0 = arith.constant 0 : i32
    return %arg0, %c0_i32 : i32, i32
  }
  func.func @transform_1(%arg0: i32) -> (i32, i32) {
    %c0_i32 = arith.constant 0 : i32
    %c0_i32_0 = arith.constant 0 : i32
    %c0_i32_1 = arith.constant 0 : i32
    return %c0_i32, %c0_i32_0 : i32, i32
  }
  func.func @transform_2(%arg0: i32) -> (i32, i32) {
    %c0_i32 = arith.constant 0 : i32
    %c0_i32_0 = arith.constant 0 : i32
    %c0_i32_1 = arith.constant 0 : i32
    return %c0_i32, %c0_i32_0 : i32, i32
  }
  func.func @transform_3(%arg0: i32) -> (i32, i32) {
    %c0_i32 = arith.constant 0 : i32
    %c0_i32_0 = arith.constant 0 : i32
    %c0_i32_1 = arith.constant 0 : i32
    return %c0_i32, %c0_i32_0 : i32, i32
  }
  func.func @transform_4(%arg0: i32) -> (i32, i32) {
    %c0_i32 = arith.constant 0 : i32
    %c0_i32_0 = arith.constant 0 : i32
    %c0_i32_1 = arith.constant 0 : i32
    return %c0_i32, %c0_i32_0 : i32, i32
  }
  func.func @transform_5(%arg0: i32) -> (i32, i32) {
    %c0_i32 = arith.constant 0 : i32
    %c0_i32_0 = arith.constant 0 : i32
    return %arg0, %c0_i32 : i32, i32
  }
}

</mosaic_0001>

<llo_original>
// kernel: tpu_custom_call.1
$region0: #{tpu_custom_call.1}
  #allocation0 [shape = 'u32[]', space=smem, size = 0x4, offset = 0x4, fixed_abs, tag = 'smem constant byte address 0x4 - core index']
  #allocation1 [shape = 'u32[144,128]{1,0:T(1,128)}', space=vmem, size = 0x12000, scoped, tag = 'internal scratch']
  %s0 = inlined_call_operand.vmem [shape: bf16[8,768], index: 0, kind: input, shape index: {}]
  %s1 = inlined_call_operand.vmem [shape: bf16[768,64], index: 1, kind: input, shape index: {}]
  %s2 = inlined_call_operand.vmem [shape: f32[1,64], index: 2, kind: input, shape index: {}]
  %s3 = inlined_call_operand.vmem [shape: f32[64,128], index: 3, kind: input, shape index: {}]
  %s4 = inlined_call_operand.vmem [shape: f32[1,128], index: 4, kind: input, shape index: {}]
  %s5 = inlined_call_operand.hbm [shape: f32[8,128], index: 5, kind: output, shape index: {}]
  %s6 = sld [smem:[#allocation0]]
  $region30: #{tpu_custom_call.1} parent=0
    _
  %s8 = ssub.s32 1, %s6
  %s9 = scalar_select 0, %s8, %s6
  $region1: #{tpu_custom_call.1} parent=0
    #allocation2 [shape = 'u8[4096]{0}', space=vmem, size = 0x1000, scoped, tag = 'output window, operand 0, single buffered']
    #allocation3 [shape = 's32[1]{0}', space=sflag, size = 0x4, scoped, tag = 'scoped memory for tpu_custom_call.1']
    %10 = vsyncpa [#allocation3], 0
    // Predicated region
    $region2: #{tpu_custom_call.1} parent=1 // pred_check
      _
    $region3: #{tpu_custom_call.1} parent=1 // pred_check_branch
      %12 = sbr.rel (0) target = $region5
    $region4: #{tpu_custom_call.1} parent=1 // pred_region
      _
    $region5: #{tpu_custom_call.1} parent=1 // pred_fallthru
      _
    // Predicated region
    $region6: #{tpu_custom_call.1} parent=1 // pred_check
      _
    $region7: #{tpu_custom_call.1} parent=1 // pred_check_branch
      %14 = sbr.rel (0) target = $region9
    $region8: #{tpu_custom_call.1} parent=1 // pred_region
      _
    $region9: #{tpu_custom_call.1} parent=1 // pred_fallthru
      _
    // Predicated region
    $region10: #{tpu_custom_call.1} parent=1 // pred_check
      _
    $region11: #{tpu_custom_call.1} parent=1 // pred_check_branch
      %16 = sbr.rel (0) target = $region13
    $region12: #{tpu_custom_call.1} parent=1 // pred_region
      _
    $region13: #{tpu_custom_call.1} parent=1 // pred_fallthru
      _
    // Predicated region
    $region14: #{tpu_custom_call.1} parent=1 // pred_check
      _
    $region15: #{tpu_custom_call.1} parent=1 // pred_check_branch
      %18 = sbr.rel (0) target = $region17
    $region16: #{tpu_custom_call.1} parent=1 // pred_region
      _
    $region17: #{tpu_custom_call.1} parent=1 // pred_fallthru
      _
    // Predicated region
    $region18: #{tpu_custom_call.1} parent=1 // pred_check
      _
    $region19: #{tpu_custom_call.1} parent=1 // pred_check_branch
      %20 = sbr.rel (0) target = $region21
    $region20: #{tpu_custom_call.1} parent=1 // pred_region
      _
    $region21: #{tpu_custom_call.1} parent=1 // pred_fallthru
      _
    %v22 = vld [vmem:[%s0] sm:$0xff]
    %v23 = vld [vmem:[%s0 + $0x8] sm:$0xff]
    %v24 = vld [vmem:[%s0 + $0x10] sm:$0xff]
    %v25 = vld [vmem:[%s1] sm:$0xf]
    %v26 = vld [vmem:[%s1 + $0x4] sm:$0xf]
    %v27 = vld [vmem:[%s1 + $0x8] sm:$0xf]
    %v28 = vld [vmem:[%s1 + $0xc] sm:$0xf]
    %v29 = vld [vmem:[%s1 + $0x10] sm:$0xf]
    %v30 = vld [vmem:[%s1 + $0x14] sm:$0xf]
    %v31 = vld [vmem:[%s1 + $0x18] sm:$0xf]
    %v32 = vld [vmem:[%s1 + $0x1c] sm:$0xf]
    %v33 = vld [vmem:[%s1 + $0x20] sm:$0xf]
    %v34 = vld [vmem:[%s1 + $0x24] sm:$0xf]
    %v35 = vld [vmem:[%s1 + $0x28] sm:$0xf]
    %v36 = vld [vmem:[%s1 + $0x2c] sm:$0xf]
    %v37 = vld [vmem:[%s1 + $0x30] sm:$0xf]
    %v38 = vld [vmem:[%s1 + $0x34] sm:$0xf]
    %v39 = vld [vmem:[%s1 + $0x38] sm:$0xf]
    %v40 = vld [vmem:[%s1 + $0x3c] sm:$0xf]
    %v41 = vld [vmem:[%s1 + $0x40] sm:$0xf]
    %v42 = vld [vmem:[%s1 + $0x44] sm:$0xf]
    %v43 = vld [vmem:[%s1 + $0x48] sm:$0xf]
    %v44 = vld [vmem:[%s1 + $0x4c] sm:$0xf]
    %v45 = vld [vmem:[%s1 + $0x50] sm:$0xf]
    %v46 = vld [vmem:[%s1 + $0x54] sm:$0xf]
    %v47 = vld [vmem:[%s1 + $0x58] sm:$0xf]
    %v48 = vld [vmem:[%s1 + $0x5c] sm:$0xf]
    %v49 = vld [vmem:[%s1 + $0x60] sm:$0xf]
    %v50 = vld [vmem:[%s1 + $0x64] sm:$0xf]
    %v51 = vld [vmem:[%s1 + $0x68] sm:$0xf]
    %v52 = vld [vmem:[%s1 + $0x6c] sm:$0xf]
    %v53 = vld [vmem:[%s1 + $0x70] sm:$0xf]
    %v54 = vld [vmem:[%s1 + $0x74] sm:$0xf]
    %v55 = vld [vmem:[%s1 + $0x78] sm:$0xf]
    %v56 = vld [vmem:[%s1 + $0x7c] sm:$0xf]
    %v57 = vld [vmem:[%s1 + $0x80] sm:$0xf]
    %v58 = vld [vmem:[%s1 + $0x84] sm:$0xf]
    %v59 = vld [vmem:[%s1 + $0x88] sm:$0xf]
    %v60 = vld [vmem:[%s1 + $0x8c] sm:$0xf]
    %v61 = vld [vmem:[%s1 + $0x90] sm:$0xf]
    %v62 = vld [vmem:[%s1 + $0x94] sm:$0xf]
    %v63 = vld [vmem:[%s1 + $0x98] sm:$0xf]
    %v64 = vld [vmem:[%s1 + $0x9c] sm:$0xf]
    %v65 = vld [vmem:[%s1 + $0xa0] sm:$0xf]
    %v66 = vld [vmem:[%s1 + $0xa4] sm:$0xf]
    %v67 = vld [vmem:[%s1 + $0xa8] sm:$0xf]
    %v68 = vld [vmem:[%s1 + $0xac] sm:$0xf]
    %v69 = vld [vmem:[%s1 + $0xb0] sm:$0xf]
    %v70 = vld [vmem:[%s1 + $0xb4] sm:$0xf]
    %v71 = vld [vmem:[%s1 + $0xb8] sm:$0xf]
    %v72 = vld [vmem:[%s1 + $0xbc] sm:$0xf]
    %v73 = vld [vmem:[%s1 + $0xc0] sm:$0xf]
    %v74 = vld [vmem:[%s1 + $0xc4] sm:$0xf]
    %v75 = vld [vmem:[%s1 + $0xc8] sm:$0xf]
    %v76 = vld [vmem:[%s1 + $0xcc] sm:$0xf]
    %v77 = vld [vmem:[%s1 + $0xd0] sm:$0xf]
    %v78 = vld [vmem:[%s1 + $0xd4] sm:$0xf]
    %v79 = vld [vmem:[%s1 + $0xd8] sm:$0xf]
    %v80 = vld [vmem:[%s1 + $0xdc] sm:$0xf]
    %v81 = vld [vmem:[%s1 + $0xe0] sm:$0xf]
    %v82 = vld [vmem:[%s1 + $0xe4] sm:$0xf]
    %v83 = vld [vmem:[%s1 + $0xe8] sm:$0xf]
    %v84 = vld [vmem:[%s1 + $0xec] sm:$0xf]
    %v85 = vld [vmem:[%s1 + $0xf0] sm:$0xf]
    %v86 = vld [vmem:[%s1 + $0xf4] sm:$0xf]
    %v87 = vld [vmem:[%s1 + $0xf8] sm:$0xf]
    %v88 = vld [vmem:[%s1 + $0xfc] sm:$0xf]
    %v89 = vld [vmem:[%s1 + $0x100] sm:$0xf]
    %v90 = vld [vmem:[%s1 + $0x104] sm:$0xf]
    %v91 = vld [vmem:[%s1 + $0x108] sm:$0xf]
    %v92 = vld [vmem:[%s1 + $0x10c] sm:$0xf]
    %v93 = vld [vmem:[%s1 + $0x110] sm:$0xf]
    %v94 = vld [vmem:[%s1 + $0x114] sm:$0xf]
    %v95 = vld [vmem:[%s1 + $0x118] sm:$0xf]
    %v96 = vld [vmem:[%s1 + $0x11c] sm:$0xf]
    %v97 = vld [vmem:[%s1 + $0x120] sm:$0xf]
    %v98 = vld [vmem:[%s1 + $0x124] sm:$0xf]
    %v99 = vld [vmem:[%s1 + $0x128] sm:$0xf]
    %v100 = vld [vmem:[%s1 + $0x12c] sm:$0xf]
    %v101 = vld [vmem:[%s1 + $0x130] sm:$0xf]
    %v102 = vld [vmem:[%s1 + $0x134] sm:$0xf]
    %v103 = vld [vmem:[%s1 + $0x138] sm:$0xf]
    %v104 = vld [vmem:[%s1 + $0x13c] sm:$0xf]
    %v105 = vld [vmem:[%s1 + $0x140] sm:$0xf]
    %v106 = vld [vmem:[%s1 + $0x144] sm:$0xf]
    %v107 = vld [vmem:[%s1 + $0x148] sm:$0xf]
    %v108 = vld [vmem:[%s1 + $0x14c] sm:$0xf]
    %v109 = vld [vmem:[%s1 + $0x150] sm:$0xf]
    %v110 = vld [vmem:[%s1 + $0x154] sm:$0xf]
    %v111 = vld [vmem:[%s1 + $0x158] sm:$0xf]
    %v112 = vld [vmem:[%s1 + $0x15c] sm:$0xf]
    %v113 = vld [vmem:[%s1 + $0x160] sm:$0xf]
    %v114 = vld [vmem:[%s1 + $0x164] sm:$0xf]
    %v115 = vld [vmem:[%s1 + $0x168] sm:$0xf]
    %v116 = vld [vmem:[%s1 + $0x16c] sm:$0xf]
    %v117 = vld [vmem:[%s1 + $0x170] sm:$0xf]
    %v118 = vld [vmem:[%s1 + $0x174] sm:$0xf]
    %v119 = vld [vmem:[%s1 + $0x178] sm:$0xf]
    %v120 = vld [vmem:[%s1 + $0x17c] sm:$0xf]
    %v121 = vld [vmem:[%s2] sm:$0x1]
    %v123 = vlaneseq
    %v124 = vshrl.u32 %v123, 7
    %v125 = vsub.s32 0, %v124
    %v126 = vrot.slane %v121, %v125
    %v131 = vunpack.c.l.b16 %v22
    %v132 = vunpack.c.h.b16 %v22
    %v133 = vunpack.c.l.b16 %v23
    %v134 = vunpack.c.h.b16 %v23
    %v135 = vunpack.c.l.b16 %v24
    %v136 = vunpack.c.h.b16 %v24
    %v137 = vpack.c.b16 %v131, %v131
    %v138 = vpack.c.b16 %v132, %v132
    %v139 = vpack.c.b16 %v133, %v133
    %v140 = vpack.c.b16 %v134, %v134
    %v141 = vpack.c.b16 %v135, %v135
    %v142 = vpack.c.b16 %v136, %v136
    %v245 = vunpack.c.l.b16 %v25
    %v246 = vunpack.c.l.b16 %v26
    %v247 = vunpack.c.l.b16 %v27
    %v248 = vunpack.c.l.b16 %v28
    %v249 = vunpack.c.l.b16 %v29
    %v250 = vunpack.c.l.b16 %v30
    %v251 = vunpack.c.l.b16 %v31
    %v252 = vunpack.c.l.b16 %v32
    %v253 = vunpack.c.l.b16 %v33
    %v254 = vunpack.c.l.b16 %v34
    %v255 = vunpack.c.l.b16 %v35
    %v256 = vunpack.c.l.b16 %v36
    %v257 = vunpack.c.l.b16 %v37
    %v258 = vunpack.c.l.b16 %v38
    %v259 = vunpack.c.l.b16 %v39
    %v260 = vunpack.c.l.b16 %v40
    %v261 = vunpack.c.l.b16 %v41
    %v262 = vunpack.c.l.b16 %v42
    %v263 = vunpack.c.l.b16 %v43
    %v264 = vunpack.c.l.b16 %v44
    %v265 = vunpack.c.l.b16 %v45
    %v266 = vunpack.c.l.b16 %v46
    %v267 = vunpack.c.l.b16 %v47
    %v268 = vunpack.c.l.b16 %v48
    %v269 = vunpack.c.l.b16 %v49
    %v270 = vunpack.c.l.b16 %v50
    %v271 = vunpack.c.l.b16 %v51
    %v272 = vunpack.c.l.b16 %v52
    %v273 = vunpack.c.l.b16 %v53
    %v274 = vunpack.c.l.b16 %v54
    %v275 = vunpack.c.l.b16 %v55
    %v276 = vunpack.c.l.b16 %v56
    %v277 = vunpack.c.l.b16 %v57
    %v278 = vunpack.c.l.b16 %v58
    %v279 = vunpack.c.l.b16 %v59
    %v280 = vunpack.c.l.b16 %v60
    %v281 = vunpack.c.l.b16 %v61
    %v282 = vunpack.c.l.b16 %v62
    %v283 = vunpack.c.l.b16 %v63
    %v284 = vunpack.c.l.b16 %v64
    %v285 = vunpack.c.l.b16 %v65
    %v286 = vunpack.c.l.b16 %v66
    %v287 = vunpack.c.l.b16 %v67
    %v288 = vunpack.c.l.b16 %v68
    %v289 = vunpack.c.l.b16 %v69
    %v290 = vunpack.c.l.b16 %v70
    %v291 = vunpack.c.l.b16 %v71
    %v292 = vunpack.c.l.b16 %v72
    %v293 = vunpack.c.l.b16 %v73
    %v294 = vunpack.c.l.b16 %v74
    %v295 = vunpack.c.l.b16 %v75
    %v296 = vunpack.c.l.b16 %v76
    %v297 = vunpack.c.l.b16 %v77
    %v298 = vunpack.c.l.b16 %v78
    %v299 = vunpack.c.l.b16 %v79
    %v300 = vunpack.c.l.b16 %v80
    %v301 = vunpack.c.l.b16 %v81
    %v302 = vunpack.c.l.b16 %v82
    %v303 = vunpack.c.l.b16 %v83
    %v304 = vunpack.c.l.b16 %v84
    %v305 = vunpack.c.l.b16 %v85
    %v306 = vunpack.c.l.b16 %v86
    %v307 = vunpack.c.l.b16 %v87
    %v308 = vunpack.c.l.b16 %v88
    %v309 = vunpack.c.l.b16 %v89
    %v310 = vunpack.c.l.b16 %v90
    %v311 = vunpack.c.l.b16 %v91
    %v312 = vunpack.c.l.b16 %v92
    %v313 = vunpack.c.l.b16 %v93
    %v314 = vunpack.c.l.b16 %v94
    %v315 = vunpack.c.l.b16 %v95
    %v316 = vunpack.c.l.b16 %v96
    %v317 = vunpack.c.l.b16 %v97
    %v318 = vunpack.c.l.b16 %v98
    %v319 = vunpack.c.l.b16 %v99
    %v320 = vunpack.c.l.b16 %v100
    %v321 = vunpack.c.l.b16 %v101
    %v322 = vunpack.c.l.b16 %v102
    %v323 = vunpack.c.l.b16 %v103
    %v324 = vunpack.c.l.b16 %v104
    %v325 = vunpack.c.l.b16 %v105
    %v326 = vunpack.c.l.b16 %v106
    %v327 = vunpack.c.l.b16 %v107
    %v328 = vunpack.c.l.b16 %v108
    %v329 = vunpack.c.l.b16 %v109
    %v330 = vunpack.c.l.b16 %v110
    %v331 = vunpack.c.l.b16 %v111
    %v332 = vunpack.c.l.b16 %v112
    %v333 = vunpack.c.l.b16 %v113
    %v334 = vunpack.c.l.b16 %v114
    %v335 = vunpack.c.l.b16 %v115
    %v336 = vunpack.c.l.b16 %v116
    %v337 = vunpack.c.l.b16 %v117
    %v338 = vunpack.c.l.b16 %v118
    %v339 = vunpack.c.l.b16 %v119
    %v340 = vunpack.c.l.b16 %v120
    %v341 = vpack.c.b16 %v246, %v245
    %v342 = vpack.c.b16 %v248, %v247
    %v343 = vpack.c.b16 %v250, %v249
    %v344 = vpack.c.b16 %v252, %v251
    %v345 = vpack.c.b16 %v254, %v253
    %v346 = vpack.c.b16 %v256, %v255
    %v347 = vpack.c.b16 %v258, %v257
    %v348 = vpack.c.b16 %v260, %v259
    %v349 = vpack.c.b16 %v262, %v261
    %v350 = vpack.c.b16 %v264, %v263
    %v351 = vpack.c.b16 %v266, %v265
    %v352 = vpack.c.b16 %v268, %v267
    %v353 = vpack.c.b16 %v270, %v269
    %v354 = vpack.c.b16 %v272, %v271
    %v355 = vpack.c.b16 %v274, %v273
    %v356 = vpack.c.b16 %v276, %v275
    %v357 = vpack.c.b16 %v278, %v277
    %v358 = vpack.c.b16 %v280, %v279
    %v359 = vpack.c.b16 %v282, %v281
    %v360 = vpack.c.b16 %v284, %v283
    %v361 = vpack.c.b16 %v286, %v285
    %v362 = vpack.c.b16 %v288, %v287
    %v363 = vpack.c.b16 %v290, %v289
    %v364 = vpack.c.b16 %v292, %v291
    %v365 = vpack.c.b16 %v294, %v293
    %v366 = vpack.c.b16 %v296, %v295
    %v367 = vpack.c.b16 %v298, %v297
    %v368 = vpack.c.b16 %v300, %v299
    %v369 = vpack.c.b16 %v302, %v301
    %v370 = vpack.c.b16 %v304, %v303
    %v371 = vpack.c.b16 %v306, %v305
    %v372 = vpack.c.b16 %v308, %v307
    %v373 = vpack.c.b16 %v310, %v309
    %v374 = vpack.c.b16 %v312, %v311
    %v375 = vpack.c.b16 %v314, %v313
    %v376 = vpack.c.b16 %v316, %v315
    %v377 = vpack.c.b16 %v318, %v317
    %v378 = vpack.c.b16 %v320, %v319
    %v379 = vpack.c.b16 %v322, %v321
    %v380 = vpack.c.b16 %v324, %v323
    %v381 = vpack.c.b16 %v326, %v325
    %v382 = vpack.c.b16 %v328, %v327
    %v383 = vpack.c.b16 %v330, %v329
    %v384 = vpack.c.b16 %v332, %v331
    %v385 = vpack.c.b16 %v334, %v333
    %v386 = vpack.c.b16 %v336, %v335
    %v387 = vpack.c.b16 %v338, %v337
    %v388 = vpack.c.b16 %v340, %v339
    %437 = vmatprep.subr.bf16.mxu0 0
    %438 = vmatpush1.bf16.msra.mxu0 %v348
    %439 = vmatprep.subr.bf16.mxu0 0
    %440 = vmatpush1.bf16.msra.mxu0 %v347
    %441 = vmatprep.subr.bf16.mxu0 0
    %442 = vmatpush1.bf16.msra.mxu0 %v346
    %443 = vmatprep.subr.bf16.mxu0 0
    %444 = vmatpush1.bf16.msra.mxu0 %v345
    %445 = vmatprep.subr.bf16.mxu0 0
    %446 = vmatpush1.bf16.msra.mxu0 %v344
    %447 = vmatprep.subr.bf16.mxu0 0
    %448 = vmatpush1.bf16.msra.mxu0 %v343
    %449 = vmatprep.subr.bf16.mxu0 0
    %450 = vmatpush1.bf16.msra.mxu0 %v342
    %451 = vmatprep.subr.bf16.mxu0 0
    %452 = vmatpush1.bf16.msra.mxu0 %v341
    %453 = vmatprep.subr.bf16.mxu0 0
    %454 = vmatpush2.bf16.msra.mxu0 %v356
    %455 = vmatprep.subr.bf16.mxu0 0
    %456 = vmatpush2.bf16.msra.mxu0 %v355
    %457 = vmatprep.subr.bf16.mxu0 0
    %458 = vmatpush2.bf16.msra.mxu0 %v354
    %459 = vmatprep.subr.bf16.mxu0 0
    %460 = vmatpush2.bf16.msra.mxu0 %v353
    %461 = vmatprep.subr.bf16.mxu0 0
    %462 = vmatpush2.bf16.msra.mxu0 %v352
    %463 = vmatprep.subr.bf16.mxu0 0
    %464 = vmatpush2.bf16.msra.mxu0 %v351
    %465 = vmatprep.subr.bf16.mxu0 0
    %466 = vmatpush2.bf16.msra.mxu0 %v350
    %467 = vmatprep.subr.bf16.mxu0 0
    %468 = vmatpush2.bf16.msra.mxu0 %v349
    %469 = vmatprep.mubr.bf16.mxu0 %v138
    %470 = vmatmul.mubr.bf16.gmra.mxu0 %v137
    %v471 = vpop.f32.mrf.mxu0
    %v472 = vadd.f32 %v126, %v471
    %v473 = vpop.f32.mrf.mxu0
    %v474 = vpop.f32.mrf.mxu0
    %v475 = vpop.f32.mrf.mxu0
    %476 = vdwg.mxu0
    %477 = vmatprep.subr.bf16.mxu0 0
    %478 = vmatpush1.bf16.msra.mxu0 %v364
    %479 = vmatprep.subr.bf16.mxu0 0
    %480 = vmatpush1.bf16.msra.mxu0 %v363
    %481 = vmatprep.subr.bf16.mxu0 0
    %482 = vmatpush1.bf16.msra.mxu0 %v362
    %483 = vmatprep.subr.bf16.mxu0 0
    %484 = vmatpush1.bf16.msra.mxu0 %v361
    %485 = vmatprep.subr.bf16.mxu0 0
    %486 = vmatpush1.bf16.msra.mxu0 %v360
    %487 = vmatprep.subr.bf16.mxu0 0
    %488 = vmatpush1.bf16.msra.mxu0 %v359
    %489 = vmatprep.subr.bf16.mxu0 0
    %490 = vmatpush1.bf16.msra.mxu0 %v358
    %491 = vmatprep.subr.bf16.mxu0 0
    %492 = vmatpush1.bf16.msra.mxu0 %v357
    %493 = vmatprep.subr.bf16.mxu0 0
    %494 = vmatpush2.bf16.msra.mxu0 %v372
    %495 = vmatprep.subr.bf16.mxu0 0
    %496 = vmatpush2.bf16.msra.mxu0 %v371
    %497 = vmatprep.subr.bf16.mxu0 0
    %498 = vmatpush2.bf16.msra.mxu0 %v370
    %499 = vmatprep.subr.bf16.mxu0 0
    %500 = vmatpush2.bf16.msra.mxu0 %v369
    %501 = vmatprep.subr.bf16.mxu0 0
    %502 = vmatpush2.bf16.msra.mxu0 %v368
    %503 = vmatprep.subr.bf16.mxu0 0
    %504 = vmatpush2.bf16.msra.mxu0 %v367
    %505 = vmatprep.subr.bf16.mxu0 0
    %506 = vmatpush2.bf16.msra.mxu0 %v366
    %507 = vmatprep.subr.bf16.mxu0 0
    %508 = vmatpush2.bf16.msra.mxu0 %v365
    %509 = vmatprep.mubr.bf16.mxu0 %v140
    %510 = vmatmul.mubr.bf16.gmra.mxu0 %v139
    %v511 = vpop.f32.mrf.mxu0
    %v512 = vadd.f32 %v472, %v511
    %v513 = vpop.f32.mrf.mxu0
    %v514 = vpop.f32.mrf.mxu0
    %v515 = vpop.f32.mrf.mxu0
    %516 = vdwg.mxu0
    %517 = vmatprep.subr.bf16.mxu0 0
    %518 = vmatpush1.bf16.msra.mxu0 %v380
    %519 = vmatprep.subr.bf16.mxu0 0
    %520 = vmatpush1.bf16.msra.mxu0 %v379
    %521 = vmatprep.subr.bf16.mxu0 0
    %522 = vmatpush1.bf16.msra.mxu0 %v378
    %523 = vmatprep.subr.bf16.mxu0 0
    %524 = vmatpush1.bf16.msra.mxu0 %v377
    %525 = vmatprep.subr.bf16.mxu0 0
    %526 = vmatpush1.bf16.msra.mxu0 %v376
    %527 = vmatprep.subr.bf16.mxu0 0
    %528 = vmatpush1.bf16.msra.mxu0 %v375
    %529 = vmatprep.subr.bf16.mxu0 0
    %530 = vmatpush1.bf16.msra.mxu0 %v374
    %531 = vmatprep.subr.bf16.mxu0 0
    %532 = vmatpush1.bf16.msra.mxu0 %v373
    %533 = vmatprep.subr.bf16.mxu0 0
    %534 = vmatpush2.bf16.msra.mxu0 %v388
    %535 = vmatprep.subr.bf16.mxu0 0
    %536 = vmatpush2.bf16.msra.mxu0 %v387
    %537 = vmatprep.subr.bf16.mxu0 0
    %538 = vmatpush2.bf16.msra.mxu0 %v386
    %539 = vmatprep.subr.bf16.mxu0 0
    %540 = vmatpush2.bf16.msra.mxu0 %v385
    %541 = vmatprep.subr.bf16.mxu0 0
    %542 = vmatpush2.bf16.msra.mxu0 %v384
    %543 = vmatprep.subr.bf16.mxu0 0
    %544 = vmatpush2.bf16.msra.mxu0 %v383
    %545 = vmatprep.subr.bf16.mxu0 0
    %546 = vmatpush2.bf16.msra.mxu0 %v382
    %547 = vmatprep.subr.bf16.mxu0 0
    %548 = vmatpush2.bf16.msra.mxu0 %v381
    %549 = vmatprep.mubr.bf16.mxu0 %v142
    %550 = vmatmul.mubr.bf16.gmra.mxu0 %v141
    %v551 = vpop.f32.mrf.mxu0
    %v552 = vadd.f32 %v512, %v551
    %v553 = vpop.f32.mrf.mxu0
    %v554 = vpop.f32.mrf.mxu0
    %v555 = vpop.f32.mrf.mxu0
    %556 = vdwg.mxu0
    %vm557 = vcmp.gt.f32.partialorder %v552, 0.0
    %v558 = vmul.f32 %v552, 0.01
    %v559 = vsel %vm557, %v552, %v558
    %v560 = vld [vmem:[%s3] sm:$0xff]
    %v561 = vld [vmem:[%s3 + $0x8] sm:$0xff]
    %v562 = vld [vmem:[%s3 + $0x10] sm:$0xff]
    %v563 = vld [vmem:[%s3 + $0x18] sm:$0xff]
    %v564 = vld [vmem:[%s3 + $0x20] sm:$0xff]
    %v565 = vld [vmem:[%s3 + $0x28] sm:$0xff]
    %v566 = vld [vmem:[%s3 + $0x30] sm:$0xff]
    %v567 = vld [vmem:[%s3 + $0x38] sm:$0xff]
    %v568 = vld [vmem:[%s4] sm:$0x1]
    %v570 = vlaneseq
    %v571 = vshrl.u32 %v570, 7
    %v572 = vsub.s32 0, %v571
    %v573 = vrot.slane %v568, %v572
    %vm575 = vcmask 523264
    %v577 = vsel %vm575, %v559, 0
    %579 = vmatprep.subr.mxu0 0.0
    %580 = vmatpush1.msra.mxu0 0.0
    %581 = vmatprep.subr.mxu0 0.0
    %582 = vmatpush1.msra.mxu0 0.0
    %583 = vmatprep.subr.mxu0 0.0
    %584 = vmatpush1.msra.mxu0 0.0
    %585 = vmatprep.subr.mxu0 0.0
    %586 = vmatpush1.msra.mxu0 0.0
    %587 = vmatprep.subr.mxu0 0.0
    %588 = vmatpush1.msra.mxu0 0.0
    %589 = vmatprep.subr.mxu0 0.0
    %590 = vmatpush1.msra.mxu0 0.0
    %591 = vmatprep.subr.mxu0 0.0
    %592 = vmatpush1.msra.mxu0 0.0
    %593 = vmatprep.subr.mxu0 0.0
    %594 = vmatpush1.msra.mxu0 0.0
    %595 = vmatprep.subr.mxu0 0.0
    %596 = vmatpush1.msra.mxu0 %v567
    %597 = vmatprep.subr.mxu0 0.0
    %598 = vmatpush1.msra.mxu0 %v566
    %599 = vmatprep.subr.mxu0 0.0
    %600 = vmatpush1.msra.mxu0 %v565
    %601 = vmatprep.subr.mxu0 0.0
    %602 = vmatpush1.msra.mxu0 %v564
    %603 = vmatprep.subr.mxu0 0.0
    %604 = vmatpush1.msra.mxu0 %v563
    %605 = vmatprep.subr.mxu0 0.0
    %606 = vmatpush1.msra.mxu0 %v562
    %607 = vmatprep.subr.mxu0 0.0
    %608 = vmatpush1.msra.mxu0 %v561
    %609 = vmatprep.subr.mxu0 0.0
    %610 = vmatpush1.msra.mxu0 %v560
    %611 = vmatprep.subr.mxu0 0.0
    %612 = vmatpush2.msra.mxu0 0.0
    %613 = vmatprep.subr.mxu0 0.0
    %614 = vmatpush2.msra.mxu0 0.0
    %615 = vmatprep.subr.mxu0 0.0
    %616 = vmatpush2.msra.mxu0 0.0
    %617 = vmatprep.subr.mxu0 0.0
    %618 = vmatpush2.msra.mxu0 0.0
    %619 = vmatprep.subr.mxu0 0.0
    %620 = vmatpush2.msra.mxu0 0.0
    %621 = vmatprep.subr.mxu0 0.0
    %622 = vmatpush2.msra.mxu0 0.0
    %623 = vmatprep.subr.mxu0 0.0
    %624 = vmatpush2.msra.mxu0 0.0
    %625 = vmatprep.subr.mxu0 0.0
    %626 = vmatpush2.msra.mxu0 0.0
    %627 = vmatprep.subr.mxu0 0.0
    %628 = vmatpush2.msra.mxu0 0.0
    %629 = vmatprep.subr.mxu0 0.0
    %630 = vmatpush2.msra.mxu0 0.0
    %631 = vmatprep.subr.mxu0 0.0
    %632 = vmatpush2.msra.mxu0 0.0
    %633 = vmatprep.subr.mxu0 0.0
    %634 = vmatpush2.msra.mxu0 0.0
    %635 = vmatprep.subr.mxu0 0.0
    %636 = vmatpush2.msra.mxu0 0.0
    %637 = vmatprep.subr.mxu0 0.0
    %638 = vmatpush2.msra.mxu0 0.0
    %639 = vmatprep.subr.mxu0 0.0
    %640 = vmatpush2.msra.mxu0 0.0
    %641 = vmatprep.subr.mxu0 0.0
    %642 = vmatpush2.msra.mxu0 0.0
    %643 = vmatprep.mubr.f32.mxu0 0.0
    %644 = vmatmul.mubr.f32.gmra.mxu0 %v577
    %v645 = vpop.f32.mrf.mxu0
    %v646 = vadd.f32 %v573, %v645
    %v647 = vpop.f32.mrf.mxu0
    %648 = vdwg.mxu0
    %649 = vst [vmem:[#allocation2] sm:$0xff] %v646
    // Predicated region
    $region22: #{tpu_custom_call.1} parent=1 // pred_check
      _
    $region23: #{tpu_custom_call.1} parent=1 // pred_check_branch
      %651 = sbr.rel (0) target = $region25
    $region24: #{tpu_custom_call.1} parent=1 // pred_region
      %s653 = ssub.s32 128, 128
      %654 = vsyncadd [#allocation3], %s653
      %s656 = sshll.u32 [#allocation2], 4
      %s657 = int_to_ptr.vmem [resolvable:$true] %s656
      %659 = dma.vmem_to_hbm [thread:$0]  %s657, 128, %s5, [#allocation3]
    $region25: #{tpu_custom_call.1} parent=1 // pred_fallthru
      _
    // Predicated region
    $region26: #{tpu_custom_call.1} parent=1 // pred_check
      _
    $region27: #{tpu_custom_call.1} parent=1 // pred_check_branch
      %661 = sbr.rel (0) target = $region29
    $region28: #{tpu_custom_call.1} parent=1 // pred_region
      %662 = dma.done [#allocation3], 128
    $region29: #{tpu_custom_call.1} parent=1 // pred_fallthru
      _
    %663 = vsyncpa [#allocation3], 1

</llo_original>
